<compile_context>
chip_gen: v5e
topology: v5e:2x2
jax: 0.10.0
libtpu: 0.0.40
codegen_flags: <defaults>
</compile_context>

<pallas_src>
import functools

import jax
import jax.numpy as jnp
from jax.experimental import pallas as pl
from jax.experimental.pallas import tpu as pltpu

# ---- model dims (fc1 = Linear(480, 64), fc2 = Linear(64, 10)) ----
IMG_FEAT = 400                 # LeNet5-style flattened image feature (16*5*5)
SND_FEAT = 80                  # flattened sound feature; 400 + 80 == 480
IN_FEAT = IMG_FEAT + SND_FEAT  # 480 == fc1.in_features
HID = 64                       # fc1.out_features
OUT = 10                       # fc2.out_features
SLAB = 2 * HID                 # 128-lane packed output: [f1 | logits(padded)]


def head_kernel(img_ref, snd_ref, w1i_ref, w1s_ref, b1_ref, w2_ref, b2_ref,
                slab_ref, f_ref):
    """Fused head: write f, (split) fc1 -> ReLU -> (dropout=identity) -> fc2.

    img_ref : (tm, 400) f32     snd_ref : (tm, 80) f32
    w1i_ref : (400, 64) bf16    w1s_ref : (80, 64) bf16    b1_ref : (1, 64) f32
    w2_ref  : (64, 64) bf16 (cols 10..63 zero)             b2_ref : (1, 64) f32
    slab_ref: (tm, 128) f32 -- lanes [0:64] = f1, lanes [64:74] = logits, rest 0
    f_ref   : (tm, 480) f32 -- torch.cat([img, snd], dim=1)
    """
    img = img_ref[...]
    snd = snd_ref[...]

    # f = cat([img, snd], dim=1): both operands are already in VMEM, so write f
    # here instead of a separate XLA concat (which would re-read both from HBM).
    f_ref[:, :IMG_FEAT] = img
    f_ref[:, IMG_FEAT:] = snd

    # fc1 split across the concat boundary: x @ W1 == img @ W1[:400] + snd @ W1[400:]
    # TODO(synk): if the upstream extractors can emit bf16 features, feed them in
    # directly and drop these casts (halves the input DMA bytes).
    h = jnp.dot(img.astype(jnp.bfloat16), w1i_ref[...],
                preferred_element_type=jnp.float32)
    h = h + jnp.dot(snd.astype(jnp.bfloat16), w1s_ref[...],
                    preferred_element_type=jnp.float32)
    h = jnp.maximum(h + b1_ref[...], 0.0)        # f1 = relu(fc1(x)), f32

    # TODO(synk): nn.Dropout(p=0.6) is identity in eval mode; a training-mode
    # kernel would need a pltpu.prng_seed/prng_random_bits mask scaled by 1/(1-p).

    logits = jnp.dot(h.astype(jnp.bfloat16), w2_ref[...],
                     preferred_element_type=jnp.float32) + b2_ref[...]

    # Lane-dense packed output slab, built in registers -> single dense store.
    slab_ref[...] = jnp.concatenate([h, logits], axis=-1)


def prepare_params(params):
    """One-time split/pad/cast of parameters into kernel layout (hoisted out of
    the per-forward path).  Weights are stored transposed vs. PyTorch, i.e.
    (in_features, out_features)."""
    w1 = jnp.asarray(params["w1"], jnp.float32)              # (480, 64)
    w1i = w1[:IMG_FEAT].astype(jnp.bfloat16)                  # (400, 64)
    w1s = w1[IMG_FEAT:].astype(jnp.bfloat16)                  # (80, 64)
    b1 = jnp.asarray(params["b1"], jnp.float32).reshape(1, HID)
    # fc2 padded from (64, 10) to (64, 64) with zero columns -> lane-dense out.
    w2p = (jnp.zeros((HID, HID), jnp.float32)
           .at[:, :OUT].set(params["w2"]).astype(jnp.bfloat16))
    b2p = (jnp.zeros((1, HID), jnp.float32)
           .at[:, :OUT].set(jnp.asarray(params["b2"]).reshape(1, OUT)))
    return (w1i, w1s, b1, w2p, b2p)


def _round_up(x, m):
    return ((x + m - 1) // m) * m


@functools.partial(jax.jit, static_argnames=("block_b",))
def soundlenet5ae_forward_mode_two(img_feature, sound_feature, prepared,
                                   block_b=1024):
    """Replicates SoundLenet5AE.forward(..., mode='two') from the flattened
    extractor features onward.  Returns (x, f, f1, sound_feature, img_feature).

    `prepared` must come from prepare_params() (called once, outside the hot path).
    """
    B = img_feature.shape[0]
    w1i, w1s, b1, w2p, b2p = prepared
    out_shape = (jax.ShapeDtypeStruct((B, SLAB), jnp.float32),
                 jax.ShapeDtypeStruct((B, IN_FEAT), jnp.float32))

    if B <= block_b:
        # Small batch: no grid, whole arrays resident in VMEM (no pipeline setup).
        vmem = pl.BlockSpec(memory_space=pltpu.MemorySpace.VMEM)
        slab, f = pl.pallas_call(
            head_kernel,
            out_shape=out_shape,
            in_specs=[vmem] * 7,
            out_specs=(vmem, vmem),
        )(img_feature, sound_feature, w1i, w1s, b1, w2p, b2p)
    else:
        # Large batch: tile over batch; weights stay resident.  Cap the tile at
        # ceil(B/2) (rounded to the 8-sublane granule) so the 'parallel' axis
        # always has >= 2 steps and v7x megacore can shard the batch across TCs.
        tm = min(block_b, _round_up(pl.cdiv(B, 2), 8))
        slab, f = pl.pallas_call(
            head_kernel,
            out_shape=out_shape,
            grid=(pl.cdiv(B, tm),),
            in_specs=[
                pl.BlockSpec((tm, IMG_FEAT), lambda i: (i, 0)),
                pl.BlockSpec((tm, SND_FEAT), lambda i: (i, 0)),
                pl.BlockSpec((IMG_FEAT, HID), lambda i: (0, 0)),
                pl.BlockSpec((SND_FEAT, HID), lambda i: (0, 0)),
                pl.BlockSpec((1, HID), lambda i: (0, 0)),
                pl.BlockSpec((HID, HID), lambda i: (0, 0)),
                pl.BlockSpec((1, HID), lambda i: (0, 0)),
            ],
            out_specs=(
                pl.BlockSpec((tm, SLAB), lambda i: (i, 0)),
                pl.BlockSpec((tm, IN_FEAT), lambda i: (i, 0)),
            ),
            compiler_params=pltpu.CompilerParams(
                dimension_semantics=("parallel",),
                vmem_limit_bytes=64 * 1024 * 1024),
        )(img_feature, sound_feature, w1i, w1s, b1, w2p, b2p)

    logits = slab[:, HID:HID + OUT]
    f1 = slab[:, :HID]
    # TODO(synk): downstream consumers that accept bf16 could take a bf16 slab
    # and halve the writeback; kept f32 here to match the PyTorch module dtypes.
    return logits, f, f1, sound_feature, img_feature


def init_params(key):
    """Deterministic init matching nn.Linear defaults (uniform +-1/sqrt(fan_in)).
    Weights are stored transposed relative to PyTorch: (in_features, out_features)."""
    k1, k2, k3, k4 = jax.random.split(key, 4)
    bound1 = 1.0 / (IN_FEAT ** 0.5)
    bound2 = 1.0 / (HID ** 0.5)
    return {
        "w1": jax.random.uniform(k1, (IN_FEAT, HID), jnp.float32, -bound1, bound1),
        "b1": jax.random.uniform(k2, (1, HID), jnp.float32, -bound1, bound1),
        "w2": jax.random.uniform(k3, (HID, OUT), jnp.float32, -bound2, bound2),
        "b2": jax.random.uniform(k4, (1, OUT), jnp.float32, -bound2, bound2),
    }


if __name__ == "__main__":
    key = jax.random.PRNGKey(0)
    kp, ki, ks = jax.random.split(key, 3)
    params = init_params(kp)
    prepared = prepare_params(params)   # one-time weight layout prep (hoisted)

    # TODO(synk): img_extractor / sound_extractor are external modules passed to
    # __init__; their flattened feature outputs are synthesized here as inputs.
    B = 8
    img_feature = jax.random.normal(ki, (B, IMG_FEAT), jnp.float32)
    sound_feature = jax.random.normal(ks, (B, SND_FEAT), jnp.float32)

    logits, f, f1, snd_out, img_out = jax.block_until_ready(
        soundlenet5ae_forward_mode_two(img_feature, sound_feature, prepared))

    # Pure-JAX f32 reference (bf16 MXU operands -> loose tolerance on matmuls).
    x_ref = jnp.concatenate([img_feature, sound_feature], axis=1)
    h_ref = jnp.maximum(x_ref @ params["w1"] + params["b1"], 0.0)
    logits_ref = h_ref @ params["w2"] + params["b2"]
    assert jnp.allclose(f, x_ref)
    assert jnp.allclose(f1, h_ref, atol=5e-2, rtol=5e-2)
    assert jnp.allclose(logits, logits_ref, atol=5e-2, rtol=5e-2)
    assert jnp.allclose(snd_out, sound_feature)
    assert jnp.allclose(img_out, img_feature)

    # Also exercise the batch-tiled (grid) path, including a ragged final tile
    # (B2 % tm != 0) to confirm masked-row writeback is handled correctly.
    B2 = 20
    ki2, ks2 = jax.random.split(jax.random.PRNGKey(1))
    img2 = jax.random.normal(ki2, (B2, IMG_FEAT), jnp.float32)
    snd2 = jax.random.normal(ks2, (B2, SND_FEAT), jnp.float32)
    logits2, f2, f12, _, _ = jax.block_until_ready(
        soundlenet5ae_forward_mode_two(img2, snd2, prepared, block_b=8))
    x2 = jnp.concatenate([img2, snd2], axis=1)
    h2 = jnp.maximum(x2 @ params["w1"] + params["b1"], 0.0)
    l2 = h2 @ params["w2"] + params["b2"]
    assert jnp.allclose(f2, x2)
    assert jnp.allclose(f12, h2, atol=5e-2, rtol=5e-2)
    assert jnp.allclose(logits2, l2, atol=5e-2, rtol=5e-2)

    print("KERNEL_OK")
</pallas_src>

<mosaic_0001>
module attributes {stable_mosaic.version = 11 : i64} {
  func.func @head_kernel(%arg0: memref<8x400xf32, #tpu.memory_space<vmem>>, %arg1: memref<8x80xf32, #tpu.memory_space<vmem>>, %arg2: memref<400x64xbf16, #tpu.memory_space<vmem>>, %arg3: memref<80x64xbf16, #tpu.memory_space<vmem>>, %arg4: memref<1x64xf32, #tpu.memory_space<vmem>>, %arg5: memref<64x64xbf16, #tpu.memory_space<vmem>>, %arg6: memref<1x64xf32, #tpu.memory_space<vmem>>, %arg7: memref<8x128xf32, #tpu.memory_space<vmem>>, %arg8: memref<8x480xf32, #tpu.memory_space<vmem>>) attributes {dimension_semantics = [], scalar_prefetch = 0 : i64, scratch_operands = 0 : i64, tpu.core_type = #tpu.core_type<tc>} {
    %c0 = arith.constant 0 : index
    %c0_0 = arith.constant 0 : index
    %0 = vector.load %arg0[%c0, %c0_0] : memref<8x400xf32, #tpu.memory_space<vmem>>, vector<8x400xf32>
    %c0_1 = arith.constant 0 : index
    %c0_2 = arith.constant 0 : index
    %1 = vector.load %arg1[%c0_1, %c0_2] : memref<8x80xf32, #tpu.memory_space<vmem>>, vector<8x80xf32>
    %c0_3 = arith.constant 0 : index
    %c0_4 = arith.constant 0 : index
    %2 = vector.load %arg8[%c0_3, %c0_4] : memref<8x480xf32, #tpu.memory_space<vmem>>, vector<8x400xf32>
    tpu.vector_store %arg8[%c0_3, %c0_4], %0 {strides = array<i32>} : memref<8x480xf32, #tpu.memory_space<vmem>>, vector<8x400xf32>,
    %c0_5 = arith.constant 0 : index
    %c400 = arith.constant 400 : index
    %3 = vector.load %arg8[%c0_5, %c400] : memref<8x480xf32, #tpu.memory_space<vmem>>, vector<8x80xf32>
    tpu.vector_store %arg8[%c0_5, %c400], %1 {strides = array<i32>} : memref<8x480xf32, #tpu.memory_space<vmem>>, vector<8x80xf32>,
    %4 = arith.truncf %0 : vector<8x400xf32> to vector<8x400xbf16>
    %c0_6 = arith.constant 0 : index
    %c0_7 = arith.constant 0 : index
    %5 = vector.load %arg2[%c0_6, %c0_7] : memref<400x64xbf16, #tpu.memory_space<vmem>>, vector<400x64xbf16>
    %cst = arith.constant dense<0.000000e+00> : vector<8x64xf32>
    %6 = tpu.matmul %4, %5, %cst {dimension_numbers = #tpu.dot_dimension_numbers<[1], [0], [0], [1], [0, 0, 1, 1], [], []>} : vector<8x400xbf16>, vector<400x64xbf16>, vector<8x64xf32> -> vector<8x64xf32>
    %7 = arith.truncf %1 : vector<8x80xf32> to vector<8x80xbf16>
    %c0_8 = arith.constant 0 : index
    %c0_9 = arith.constant 0 : index
    %8 = vector.load %arg3[%c0_8, %c0_9] : memref<80x64xbf16, #tpu.memory_space<vmem>>, vector<80x64xbf16>
    %cst_10 = arith.constant dense<0.000000e+00> : vector<8x64xf32>
    %9 = tpu.matmul %7, %8, %cst_10 {dimension_numbers = #tpu.dot_dimension_numbers<[1], [0], [0], [1], [0, 0, 1, 1], [], []>} : vector<8x80xbf16>, vector<80x64xbf16>, vector<8x64xf32> -> vector<8x64xf32>
    %10 = arith.addf %6, %9 : vector<8x64xf32>
    %c0_11 = arith.constant 0 : index
    %c0_12 = arith.constant 0 : index
    %11 = vector.load %arg4[%c0_11, %c0_12] : memref<1x64xf32, #tpu.memory_space<vmem>>, vector<1x64xf32>
    %12 = vector.broadcast %11 : vector<1x64xf32> to vector<8x64xf32>
    %13 = arith.addf %10, %12 : vector<8x64xf32>
    %cst_13 = arith.constant 0.000000e+00 : f32
    %14 = vector.broadcast %cst_13 : f32 to vector<8x64xf32>
    %15 = arith.maximumf %13, %14 : vector<8x64xf32>
    %16 = arith.truncf %15 : vector<8x64xf32> to vector<8x64xbf16>
    %c0_14 = arith.constant 0 : index
    %c0_15 = arith.constant 0 : index
    %17 = vector.load %arg5[%c0_14, %c0_15] : memref<64x64xbf16, #tpu.memory_space<vmem>>, vector<64x64xbf16>
    %cst_16 = arith.constant dense<0.000000e+00> : vector<8x64xf32>
    %18 = tpu.matmul %16, %17, %cst_16 {dimension_numbers = #tpu.dot_dimension_numbers<[1], [0], [0], [1], [0, 0, 1, 1], [], []>} : vector<8x64xbf16>, vector<64x64xbf16>, vector<8x64xf32> -> vector<8x64xf32>
    %c0_17 = arith.constant 0 : index
    %c0_18 = arith.constant 0 : index
    %19 = vector.load %arg6[%c0_17, %c0_18] : memref<1x64xf32, #tpu.memory_space<vmem>>, vector<1x64xf32>
    %20 = vector.broadcast %19 : vector<1x64xf32> to vector<8x64xf32>
    %21 = arith.addf %18, %20 : vector<8x64xf32>
    %22 = tpu.concatenate %15, %21 in 1 : vector<8x64xf32>, vector<8x64xf32> -> vector<8x128xf32>
    %c0_19 = arith.constant 0 : index
    %c0_20 = arith.constant 0 : index
    %23 = vector.load %arg7[%c0_19, %c0_20] : memref<8x128xf32, #tpu.memory_space<vmem>>, vector<8x128xf32>
    tpu.vector_store %arg7[%c0_19, %c0_20], %22 {strides = array<i32>} : memref<8x128xf32, #tpu.memory_space<vmem>>, vector<8x128xf32>,
    return
  }
}

</mosaic_0001>

<llo_original>
// kernel: soundlenet5ae_forward_mode_two.1
$region0: #{soundlenet5ae_forward_mode_two.1}
  #allocation0 [shape = 'u32[]', space=smem, size = 0x4, offset = 0x4, fixed_abs, tag = 'smem constant byte address 0x4 - core index']
  #allocation1 [shape = 'u32[72,128]{1,0:T(1,128)}', space=vmem, size = 0x9000, scoped, tag = 'internal scratch']
  %s0 = inlined_call_operand.vmem [shape: f32[8,400], index: 0, kind: input, shape index: {}]
  %s1 = inlined_call_operand.vmem [shape: f32[8,80], index: 1, kind: input, shape index: {}]
  %s2 = inlined_call_operand.vmem [shape: bf16[400,64], index: 2, kind: input, shape index: {}]
  %s3 = inlined_call_operand.vmem [shape: bf16[80,64], index: 3, kind: input, shape index: {}]
  %s4 = inlined_call_operand.vmem [shape: f32[1,64], index: 4, kind: input, shape index: {}]
  %s5 = inlined_call_operand.vmem [shape: bf16[64,64], index: 5, kind: input, shape index: {}]
  %s6 = inlined_call_operand.vmem [shape: f32[1,64], index: 6, kind: input, shape index: {}]
  %s7 = inlined_call_operand.vmem [shape: f32[8,128], index: 7, kind: output, shape index: {0}]
  %s8 = inlined_call_operand.hbm [shape: f32[8,480], index: 8, kind: output, shape index: {1}]
  %9 = xla_tuple %s7, %s8
  %s10 = sld [smem:[#allocation0]]
  $region46: #{soundlenet5ae_forward_mode_two.1} parent=0
    _
  %s12 = ssub.s32 1, %s10
  %s13 = scalar_select 0, %s12, %s10
  $region1: #{soundlenet5ae_forward_mode_two.1} parent=0
    #allocation2 [shape = 'u8[16384]{0}', space=vmem, size = 0x4000, scoped, tag = 'output window, operand 1, single buffered']
    #allocation3 [shape = 's32[1]{0}', space=sflag, size = 0x4, scoped, tag = 'scoped memory for soundlenet5ae_forward_mode_two.1']
    %14 = vsyncpa [#allocation3], 0
    // Predicated region
    $region2: #{soundlenet5ae_forward_mode_two.1} parent=1 // pred_check
      _
    $region3: #{soundlenet5ae_forward_mode_two.1} parent=1 // pred_check_branch
      %16 = sbr.rel (0) target = $region5
    $region4: #{soundlenet5ae_forward_mode_two.1} parent=1 // pred_region
      _
    $region5: #{soundlenet5ae_forward_mode_two.1} parent=1 // pred_fallthru
      _
    // Predicated region
    $region6: #{soundlenet5ae_forward_mode_two.1} parent=1 // pred_check
      _
    $region7: #{soundlenet5ae_forward_mode_two.1} parent=1 // pred_check_branch
      %18 = sbr.rel (0) target = $region9
    $region8: #{soundlenet5ae_forward_mode_two.1} parent=1 // pred_region
      _
    $region9: #{soundlenet5ae_forward_mode_two.1} parent=1 // pred_fallthru
      _
    // Predicated region
    $region10: #{soundlenet5ae_forward_mode_two.1} parent=1 // pred_check
      _
    $region11: #{soundlenet5ae_forward_mode_two.1} parent=1 // pred_check_branch
      %20 = sbr.rel (0) target = $region13
    $region12: #{soundlenet5ae_forward_mode_two.1} parent=1 // pred_region
      _
    $region13: #{soundlenet5ae_forward_mode_two.1} parent=1 // pred_fallthru
      _
    // Predicated region
    $region14: #{soundlenet5ae_forward_mode_two.1} parent=1 // pred_check
      _
    $region15: #{soundlenet5ae_forward_mode_two.1} parent=1 // pred_check_branch
      %22 = sbr.rel (0) target = $region17
    $region16: #{soundlenet5ae_forward_mode_two.1} parent=1 // pred_region
      _
    $region17: #{soundlenet5ae_forward_mode_two.1} parent=1 // pred_fallthru
      _
    // Predicated region
    $region18: #{soundlenet5ae_forward_mode_two.1} parent=1 // pred_check
      _
    $region19: #{soundlenet5ae_forward_mode_two.1} parent=1 // pred_check_branch
      %24 = sbr.rel (0) target = $region21
    $region20: #{soundlenet5ae_forward_mode_two.1} parent=1 // pred_region
      _
    $region21: #{soundlenet5ae_forward_mode_two.1} parent=1 // pred_fallthru
      _
    // Predicated region
    $region22: #{soundlenet5ae_forward_mode_two.1} parent=1 // pred_check
      _
    $region23: #{soundlenet5ae_forward_mode_two.1} parent=1 // pred_check_branch
      %26 = sbr.rel (0) target = $region25
    $region24: #{soundlenet5ae_forward_mode_two.1} parent=1 // pred_region
      _
    $region25: #{soundlenet5ae_forward_mode_two.1} parent=1 // pred_fallthru
      _
    // Predicated region
    $region26: #{soundlenet5ae_forward_mode_two.1} parent=1 // pred_check
      _
    $region27: #{soundlenet5ae_forward_mode_two.1} parent=1 // pred_check_branch
      %28 = sbr.rel (0) target = $region29
    $region28: #{soundlenet5ae_forward_mode_two.1} parent=1 // pred_region
      _
    $region29: #{soundlenet5ae_forward_mode_two.1} parent=1 // pred_fallthru
      _
    %v30 = vld [vmem:[%s0] sm:$0xff]
    %v31 = vld [vmem:[%s0 + $0x8] sm:$0xff]
    %v32 = vld [vmem:[%s0 + $0x10] sm:$0xff]
    %v33 = vld [vmem:[%s0 + $0x18] sm:$0xff]
    %v34 = vld [vmem:[%s1] sm:$0xff]
    %35 = vst [vmem:[#allocation2] sm:$0xff] %v30
    %36 = vst [vmem:[#allocation2 + $0x8] sm:$0xff] %v31
    %37 = vst [vmem:[#allocation2 + $0x10] sm:$0xff] %v32
    %vm38 = vcmask 130048
    %39 = vst.msk [vmem:[#allocation2 + $0x18] sm:$0xff] %vm38, %v33
    %41 = vrot.lane.b32.xlu0 %v34, 16
    %v42 = vpop.permute.xlu0 %41
    %vm44 = vcmask 785536
    %45 = vst.msk [vmem:[#allocation2 + $0x18] sm:$0xff] %vm44, %v42
    %v46 = vpack.c.bf16 %v30, %v30
    %v47 = vpack.c.bf16 %v31, %v31
    %v48 = vpack.c.bf16 %v32, %v32
    %v49 = vpack.c.bf16 %v33, %v33
    %v50 = vld [vmem:[%s2] sm:$0xf]
    %v51 = vld [vmem:[%s2 + $0x4] sm:$0xf]
    %v52 = vld [vmem:[%s2 + $0x8] sm:$0xf]
    %v53 = vld [vmem:[%s2 + $0xc] sm:$0xf]
    %v54 = vld [vmem:[%s2 + $0x10] sm:$0xf]
    %v55 = vld [vmem:[%s2 + $0x14] sm:$0xf]
    %v56 = vld [vmem:[%s2 + $0x18] sm:$0xf]
    %v57 = vld [vmem:[%s2 + $0x1c] sm:$0xf]
    %v58 = vld [vmem:[%s2 + $0x20] sm:$0xf]
    %v59 = vld [vmem:[%s2 + $0x24] sm:$0xf]
    %v60 = vld [vmem:[%s2 + $0x28] sm:$0xf]
    %v61 = vld [vmem:[%s2 + $0x2c] sm:$0xf]
    %v62 = vld [vmem:[%s2 + $0x30] sm:$0xf]
    %v63 = vld [vmem:[%s2 + $0x34] sm:$0xf]
    %v64 = vld [vmem:[%s2 + $0x38] sm:$0xf]
    %v65 = vld [vmem:[%s2 + $0x3c] sm:$0xf]
    %v66 = vld [vmem:[%s2 + $0x40] sm:$0xf]
    %v67 = vld [vmem:[%s2 + $0x44] sm:$0xf]
    %v68 = vld [vmem:[%s2 + $0x48] sm:$0xf]
    %v69 = vld [vmem:[%s2 + $0x4c] sm:$0xf]
    %v70 = vld [vmem:[%s2 + $0x50] sm:$0xf]
    %v71 = vld [vmem:[%s2 + $0x54] sm:$0xf]
    %v72 = vld [vmem:[%s2 + $0x58] sm:$0xf]
    %v73 = vld [vmem:[%s2 + $0x5c] sm:$0xf]
    %v74 = vld [vmem:[%s2 + $0x60] sm:$0xf]
    %v75 = vld [vmem:[%s2 + $0x64] sm:$0xf]
    %v76 = vld [vmem:[%s2 + $0x68] sm:$0xf]
    %v77 = vld [vmem:[%s2 + $0x6c] sm:$0xf]
    %v78 = vld [vmem:[%s2 + $0x70] sm:$0xf]
    %v79 = vld [vmem:[%s2 + $0x74] sm:$0xf]
    %v80 = vld [vmem:[%s2 + $0x78] sm:$0xf]
    %v81 = vld [vmem:[%s2 + $0x7c] sm:$0xf]
    %v82 = vld [vmem:[%s2 + $0x80] sm:$0xf]
    %v83 = vld [vmem:[%s2 + $0x84] sm:$0xf]
    %v84 = vld [vmem:[%s2 + $0x88] sm:$0xf]
    %v85 = vld [vmem:[%s2 + $0x8c] sm:$0xf]
    %v86 = vld [vmem:[%s2 + $0x90] sm:$0xf]
    %v87 = vld [vmem:[%s2 + $0x94] sm:$0xf]
    %v88 = vld [vmem:[%s2 + $0x98] sm:$0xf]
    %v89 = vld [vmem:[%s2 + $0x9c] sm:$0xf]
    %v90 = vld [vmem:[%s2 + $0xa0] sm:$0xf]
    %v91 = vld [vmem:[%s2 + $0xa4] sm:$0xf]
    %v92 = vld [vmem:[%s2 + $0xa8] sm:$0xf]
    %v93 = vld [vmem:[%s2 + $0xac] sm:$0xf]
    %v94 = vld [vmem:[%s2 + $0xb0] sm:$0xf]
    %v95 = vld [vmem:[%s2 + $0xb4] sm:$0xf]
    %v96 = vld [vmem:[%s2 + $0xb8] sm:$0xf]
    %v97 = vld [vmem:[%s2 + $0xbc] sm:$0xf]
    %v98 = vld [vmem:[%s2 + $0xc0] sm:$0xf]
    %v99 = vld [vmem:[%s2 + $0xc4] sm:$0xf]
    %v100 = vpack.c.bf16 %v34, %v34
    %v101 = vld [vmem:[%s3] sm:$0xf]
    %v102 = vld [vmem:[%s3 + $0x4] sm:$0xf]
    %v103 = vld [vmem:[%s3 + $0x8] sm:$0xf]
    %v104 = vld [vmem:[%s3 + $0xc] sm:$0xf]
    %v105 = vld [vmem:[%s3 + $0x10] sm:$0xf]
    %v106 = vld [vmem:[%s3 + $0x14] sm:$0xf]
    %v107 = vld [vmem:[%s3 + $0x18] sm:$0xf]
    %v108 = vld [vmem:[%s3 + $0x1c] sm:$0xf]
    %v109 = vld [vmem:[%s3 + $0x20] sm:$0xf]
    %v110 = vld [vmem:[%s3 + $0x24] sm:$0xf]
    %v121 = vunpack.c.l.b16 %v101
    %v122 = vunpack.c.l.b16 %v102
    %v123 = vunpack.c.l.b16 %v103
    %v124 = vunpack.c.l.b16 %v104
    %v125 = vunpack.c.l.b16 %v105
    %v126 = vunpack.c.l.b16 %v106
    %v127 = vunpack.c.l.b16 %v107
    %v128 = vunpack.c.l.b16 %v108
    %v129 = vunpack.c.l.b16 %v109
    %v130 = vunpack.c.l.b16 %v110
    %v131 = vpack.c.b16 %v122, %v121
    %v132 = vpack.c.b16 %v124, %v123
    %v133 = vpack.c.b16 %v126, %v125
    %v134 = vpack.c.b16 %v128, %v127
    %v135 = vpack.c.b16 %v130, %v129
    %vm141 = vcmask 654336
    %v143 = vsel %vm141, %v100, 0
    %145 = vmatpush.bf16.msra.mxu0 0
    %146 = vmatpush.bf16.msra.mxu0 0
    %147 = vmatpush.bf16.msra.mxu0 0
    %148 = vmatpush.bf16.msra.mxu0 %v135
    %149 = vmatpush.bf16.msra.mxu0 %v134
    %150 = vmatpush.bf16.msra.mxu0 %v133
    %151 = vmatpush.bf16.msra.mxu0 %v132
    %152 = vmatpush.bf16.msra.mxu0 %v131
    %153 = vmatmul.bf16.gmra.mxu0 %v143
    %v154 = vpop.f32.mrf.mxu0
    %v155 = vadd.f32 0.0, %v154
    %v156 = vpop.f32.mrf.mxu0
    %157 = vdwg.mxu0
    %v208 = vunpack.c.l.b16 %v50
    %v209 = vunpack.c.l.b16 %v51
    %v210 = vunpack.c.l.b16 %v52
    %v211 = vunpack.c.l.b16 %v53
    %v212 = vunpack.c.l.b16 %v54
    %v213 = vunpack.c.l.b16 %v55
    %v214 = vunpack.c.l.b16 %v56
    %v215 = vunpack.c.l.b16 %v57
    %v216 = vunpack.c.l.b16 %v58
    %v217 = vunpack.c.l.b16 %v59
    %v218 = vunpack.c.l.b16 %v60
    %v219 = vunpack.c.l.b16 %v61
    %v220 = vunpack.c.l.b16 %v62
    %v221 = vunpack.c.l.b16 %v63
    %v222 = vunpack.c.l.b16 %v64
    %v223 = vunpack.c.l.b16 %v65
    %v224 = vunpack.c.l.b16 %v66
    %v225 = vunpack.c.l.b16 %v67
    %v226 = vunpack.c.l.b16 %v68
    %v227 = vunpack.c.l.b16 %v69
    %v228 = vunpack.c.l.b16 %v70
    %v229 = vunpack.c.l.b16 %v71
    %v230 = vunpack.c.l.b16 %v72
    %v231 = vunpack.c.l.b16 %v73
    %v232 = vunpack.c.l.b16 %v74
    %v233 = vunpack.c.l.b16 %v75
    %v234 = vunpack.c.l.b16 %v76
    %v235 = vunpack.c.l.b16 %v77
    %v236 = vunpack.c.l.b16 %v78
    %v237 = vunpack.c.l.b16 %v79
    %v238 = vunpack.c.l.b16 %v80
    %v239 = vunpack.c.l.b16 %v81
    %v240 = vunpack.c.l.b16 %v82
    %v241 = vunpack.c.l.b16 %v83
    %v242 = vunpack.c.l.b16 %v84
    %v243 = vunpack.c.l.b16 %v85
    %v244 = vunpack.c.l.b16 %v86
    %v245 = vunpack.c.l.b16 %v87
    %v246 = vunpack.c.l.b16 %v88
    %v247 = vunpack.c.l.b16 %v89
    %v248 = vunpack.c.l.b16 %v90
    %v249 = vunpack.c.l.b16 %v91
    %v250 = vunpack.c.l.b16 %v92
    %v251 = vunpack.c.l.b16 %v93
    %v252 = vunpack.c.l.b16 %v94
    %v253 = vunpack.c.l.b16 %v95
    %v254 = vunpack.c.l.b16 %v96
    %v255 = vunpack.c.l.b16 %v97
    %v256 = vunpack.c.l.b16 %v98
    %v257 = vunpack.c.l.b16 %v99
    %v258 = vpack.c.b16 %v209, %v208
    %v259 = vpack.c.b16 %v211, %v210
    %v260 = vpack.c.b16 %v213, %v212
    %v261 = vpack.c.b16 %v215, %v214
    %v262 = vpack.c.b16 %v217, %v216
    %v263 = vpack.c.b16 %v219, %v218
    %v264 = vpack.c.b16 %v221, %v220
    %v265 = vpack.c.b16 %v223, %v222
    %v266 = vpack.c.b16 %v225, %v224
    %v267 = vpack.c.b16 %v227, %v226
    %v268 = vpack.c.b16 %v229, %v228
    %v269 = vpack.c.b16 %v231, %v230
    %v270 = vpack.c.b16 %v233, %v232
    %v271 = vpack.c.b16 %v235, %v234
    %v272 = vpack.c.b16 %v237, %v236
    %v273 = vpack.c.b16 %v239, %v238
    %v274 = vpack.c.b16 %v241, %v240
    %v275 = vpack.c.b16 %v243, %v242
    %v276 = vpack.c.b16 %v245, %v244
    %v277 = vpack.c.b16 %v247, %v246
    %v278 = vpack.c.b16 %v249, %v248
    %v279 = vpack.c.b16 %v251, %v250
    %v280 = vpack.c.b16 %v253, %v252
    %v281 = vpack.c.b16 %v255, %v254
    %v282 = vpack.c.b16 %v257, %v256
    %v309 = vsel %vm38, %v49, 0
    %311 = vmatpush.bf16.msra.mxu0 %v265
    %312 = vmatpush.bf16.msra.mxu0 %v264
    %313 = vmatpush.bf16.msra.mxu0 %v263
    %314 = vmatpush.bf16.msra.mxu0 %v262
    %315 = vmatpush.bf16.msra.mxu0 %v261
    %316 = vmatpush.bf16.msra.mxu0 %v260
    %317 = vmatpush.bf16.msra.mxu0 %v259
    %318 = vmatpush.bf16.msra.mxu0 %v258
    %319 = vmatmul.bf16.gmra.mxu0 %v46
    %v320 = vpop.f32.mrf.mxu0
    %v321 = vadd.f32 %v155, %v320
    %v322 = vpop.f32.mrf.mxu0
    %323 = vdwg.mxu0
    %324 = vmatpush.bf16.msra.mxu0 %v273
    %325 = vmatpush.bf16.msra.mxu0 %v272
    %326 = vmatpush.bf16.msra.mxu0 %v271
    %327 = vmatpush.bf16.msra.mxu0 %v270
    %328 = vmatpush.bf16.msra.mxu0 %v269
    %329 = vmatpush.bf16.msra.mxu0 %v268
    %330 = vmatpush.bf16.msra.mxu0 %v267
    %331 = vmatpush.bf16.msra.mxu0 %v266
    %332 = vmatmul.bf16.gmra.mxu0 %v47
    %v333 = vpop.f32.mrf.mxu0
    %v334 = vadd.f32 %v321, %v333
    %v335 = vpop.f32.mrf.mxu0
    %336 = vdwg.mxu0
    %337 = vmatpush.bf16.msra.mxu0 %v281
    %338 = vmatpush.bf16.msra.mxu0 %v280
    %339 = vmatpush.bf16.msra.mxu0 %v279
    %340 = vmatpush.bf16.msra.mxu0 %v278
    %341 = vmatpush.bf16.msra.mxu0 %v277
    %342 = vmatpush.bf16.msra.mxu0 %v276
    %343 = vmatpush.bf16.msra.mxu0 %v275
    %344 = vmatpush.bf16.msra.mxu0 %v274
    %345 = vmatmul.bf16.gmra.mxu0 %v48
    %v346 = vpop.f32.mrf.mxu0
    %v347 = vadd.f32 %v334, %v346
    %v348 = vpop.f32.mrf.mxu0
    %349 = vdwg.mxu0
    %350 = vmatpush.bf16.msra.mxu0 0
    %351 = vmatpush.bf16.msra.mxu0 0
    %352 = vmatpush.bf16.msra.mxu0 0
    %353 = vmatpush.bf16.msra.mxu0 0
    %354 = vmatpush.bf16.msra.mxu0 0
    %355 = vmatpush.bf16.msra.mxu0 0
    %356 = vmatpush.bf16.msra.mxu0 0
    %357 = vmatpush.bf16.msra.mxu0 %v282
    %358 = vmatmul.bf16.gmra.mxu0 %v309
    %v359 = vpop.f32.mrf.mxu0
    %v360 = vadd.f32 %v347, %v359
    %v361 = vpop.f32.mrf.mxu0
    %362 = vdwg.mxu0
    %v363 = vld [vmem:[%s4] sm:$0x1]
    %v365 = vperm.slane %v363, 0
    %v367 = vadd.f32 %v360, %v365
    %v368 = vmax.f32 %v367, 0.0
    %v369 = vpack.c.bf16 %v368, %v368
    %v370 = vld [vmem:[%s5] sm:$0xf]
    %v371 = vld [vmem:[%s5 + $0x4] sm:$0xf]
    %v372 = vld [vmem:[%s5 + $0x8] sm:$0xf]
    %v373 = vld [vmem:[%s5 + $0xc] sm:$0xf]
    %v374 = vld [vmem:[%s5 + $0x10] sm:$0xf]
    %v375 = vld [vmem:[%s5 + $0x14] sm:$0xf]
    %v376 = vld [vmem:[%s5 + $0x18] sm:$0xf]
    %v377 = vld [vmem:[%s5 + $0x1c] sm:$0xf]
    %v378 = vld [vmem:[%s6] sm:$0x1]
    %v380 = vperm.slane %v378, 0
    %v390 = vunpack.c.l.b16 %v370
    %v391 = vunpack.c.l.b16 %v371
    %v392 = vunpack.c.l.b16 %v372
    %v393 = vunpack.c.l.b16 %v373
    %v394 = vunpack.c.l.b16 %v374
    %v395 = vunpack.c.l.b16 %v375
    %v396 = vunpack.c.l.b16 %v376
    %v397 = vunpack.c.l.b16 %v377
    %v398 = vpack.c.b16 %v391, %v390
    %v399 = vpack.c.b16 %v393, %v392
    %v400 = vpack.c.b16 %v395, %v394
    %v401 = vpack.c.b16 %v397, %v396
    %vm406 = vcmask 523264
    %v408 = vsel %vm406, %v369, 0
    %410 = vmatpush.bf16.msra.mxu0 0
    %411 = vmatpush.bf16.msra.mxu0 0
    %412 = vmatpush.bf16.msra.mxu0 0
    %413 = vmatpush.bf16.msra.mxu0 0
    %414 = vmatpush.bf16.msra.mxu0 %v401
    %415 = vmatpush.bf16.msra.mxu0 %v400
    %416 = vmatpush.bf16.msra.mxu0 %v399
    %417 = vmatpush.bf16.msra.mxu0 %v398
    %418 = vmatmul.bf16.gmra.mxu0 %v408
    %v419 = vpop.f32.mrf.mxu0
    %v420 = vadd.f32 %v380, %v419
    %v421 = vpop.f32.mrf.mxu0
    %422 = vdwg.mxu0
    %424 = vrot.lane.b32.xlu0 %v420, 64
    %v425 = vpop.permute.xlu0 %424
    %v427 = vsel %vm406, %v368, %v425
    %428 = vst [vmem:[%s7] sm:$0xff] %v427
    // Predicated region
    $region30: #{soundlenet5ae_forward_mode_two.1} parent=1 // pred_check
      _
    $region31: #{soundlenet5ae_forward_mode_two.1} parent=1 // pred_check_branch
      %430 = sbr.rel (0) target = $region33
    $region32: #{soundlenet5ae_forward_mode_two.1} parent=1 // pred_region
      _
    $region33: #{soundlenet5ae_forward_mode_two.1} parent=1 // pred_fallthru
      _
    // Predicated region
    $region34: #{soundlenet5ae_forward_mode_two.1} parent=1 // pred_check
      _
    $region35: #{soundlenet5ae_forward_mode_two.1} parent=1 // pred_check_branch
      %432 = sbr.rel (0) target = $region37
    $region36: #{soundlenet5ae_forward_mode_two.1} parent=1 // pred_region
      %434 = vsyncadd [#allocation3], 0
      %s436 = sshll.u32 [#allocation2], 4
      %s437 = int_to_ptr.vmem [resolvable:$true] %s436
      %s438 = sshll.u32 %s8, 4
      %s439 = int_to_ptr.hbm [resolvable:$true] %s438
      %441 = dma.vmem_to_hbm [thread:$0]  %s437, 512, %s439, [#allocation3]
    $region37: #{soundlenet5ae_forward_mode_two.1} parent=1 // pred_fallthru
      _
    // Predicated region
    $region38: #{soundlenet5ae_forward_mode_two.1} parent=1 // pred_check
      _
    $region39: #{soundlenet5ae_forward_mode_two.1} parent=1 // pred_check_branch
      %443 = sbr.rel (0) target = $region41
    $region40: #{soundlenet5ae_forward_mode_two.1} parent=1 // pred_region
      _
    $region41: #{soundlenet5ae_forward_mode_two.1} parent=1 // pred_fallthru
      _
    // Predicated region
    $region42: #{soundlenet5ae_forward_mode_two.1} parent=1 // pred_check
      _
    $region43: #{soundlenet5ae_forward_mode_two.1} parent=1 // pred_check_branch
      %445 = sbr.rel (0) target = $region45
    $region44: #{soundlenet5ae_forward_mode_two.1} parent=1 // pred_region
      %447 = dma.done [#allocation3], 512
    $region45: #{soundlenet5ae_forward_mode_two.1} parent=1 // pred_fallthru
      _
    %448 = vsyncpa [#allocation3], 1

</llo_original>
